<compile_context>
chip_gen: v7x
topology: tpu7x:2x2x1
jax: 0.10.0
libtpu: 0.0.40
codegen_flags: <defaults>
</compile_context>

<pallas_src>
import functools

import jax
import jax.numpy as jnp
from jax.experimental import pallas as pl
from jax.experimental.pallas import tpu as pltpu


def _round_up(x, m):
    return (x + m - 1) // m * m


def hgnn_fused_kernel(l_ref, x_ref, w_ref, b_ref, o_ref, acc_ref, act_ref,
                      *, tile, n_pad):
    """Grid = (layer, row tile i, contraction tile k).

    Per step:  acc[i] += L[i, k] @ (X_prev[k] @ W_layer + b_layer)
    At k == last:  hidden layer -> ReLU -> ping-pong activation scratch,
                   final layer  -> sigmoid -> output block (single store).
    """
    layer = pl.program_id(0)
    i = pl.program_id(1)
    k = pl.program_id(2)
    n_layers = pl.num_programs(0)
    nk = pl.num_programs(2)

    # Ping-pong activation buffer: rows [0, n_pad) = slot 0, [n_pad, 2*n_pad) = slot 1.
    read_base = ((layer + 1) & 1) * n_pad   # layer 0 reads slot 1 (staged input X)
    write_base = (layer & 1) * n_pad

    # Stage the padded bf16 input features into slot 1 exactly once (layer 0,
    # first row tile), so every layer reads its input from VMEM, never HBM.
    @pl.when(jnp.logical_and(layer == 0, i == 0))
    def _():
        act_ref[pl.ds(pl.multiple_of(n_pad + k * tile, tile), tile), :] = x_ref[...]

    @pl.when(k == 0)
    def _():
        acc_ref[...] = jnp.zeros_like(acc_ref)

    # theta:  (tile, Cpad) @ (Cpad, Cpad) + bias            -> MXU, f32 accumulate
    x_k = act_ref[pl.ds(pl.multiple_of(read_base + k * tile, tile), tile), :]
    t = jnp.dot(x_k, w_ref[...], preferred_element_type=jnp.float32) + b_ref[...]
    # smoothing partial product:  (tile, tile) @ (tile, Cpad) -> MXU
    acc_ref[...] += jnp.dot(l_ref[...], t.astype(jnp.bfloat16),
                            preferred_element_type=jnp.float32)

    @pl.when(k == nk - 1)
    def _():
        acc = acc_ref[...]

        @pl.when(layer < n_layers - 1)
        def _():
            act_ref[pl.ds(pl.multiple_of(write_base + i * tile, tile), tile), :] = (
                jnp.maximum(acc, 0.0).astype(act_ref.dtype))

        @pl.when(layer == n_layers - 1)
        def _():
            # model-level sigmoid fused into the last layer
            o_ref[...] = jax.nn.sigmoid(acc).astype(o_ref.dtype)


def hgnn_forward(X, L, params, *, tile=128, lane=128):
    """Full HGNN forward (all HGNNConv layers + final sigmoid) in one pallas_call."""
    n, c_in = X.shape
    n_layers = len(params)
    out_dim = params[-1][0].shape[1]
    dims = [c_in] + [w.shape[1] for w, _ in params]
    c_pad = _round_up(max(dims), lane)     # lane-dense feature width
    n_pad = _round_up(n, tile)

    # Zero-pad + cast operands (bf16 matmul operands, f32 bias / accumulation).
    l_p = jnp.zeros((n_pad, n_pad), jnp.bfloat16).at[:n, :n].set(L.astype(jnp.bfloat16))
    x_p = jnp.zeros((n_pad, c_pad), jnp.bfloat16).at[:n, :c_in].set(X.astype(jnp.bfloat16))
    w_s = jnp.zeros((n_layers, c_pad, c_pad), jnp.bfloat16)
    b_s = jnp.zeros((n_layers, 1, c_pad), jnp.float32)
    for idx, (w, b) in enumerate(params):
        cin, cout = w.shape
        w_s = w_s.at[idx, :cin, :cout].set(w.astype(jnp.bfloat16))
        b_s = b_s.at[idx, 0, :cout].set(b.reshape(-1).astype(jnp.float32))

    grid = (n_layers, n_pad // tile, n_pad // tile)
    kernel = functools.partial(hgnn_fused_kernel, tile=tile, n_pad=n_pad)

    out = pl.pallas_call(
        kernel,
        out_shape=jax.ShapeDtypeStruct((n_pad, c_pad), jnp.float32),
        grid=grid,
        in_specs=[
            # L tile, streamed & double-buffered; loaded once per layer.
            pl.BlockSpec((tile, tile), lambda l, i, k: (i, k)),
            # Input features: only consumed at layer 0 (staged into VMEM scratch).
            pl.BlockSpec((tile, c_pad), lambda l, i, k: (jnp.where(l == 0, k, 0), 0)),
            # Per-layer weight / bias (layer axis squeezed out of the kernel ref).
            pl.BlockSpec((None, c_pad, c_pad), lambda l, i, k: (l, 0, 0)),
            pl.BlockSpec((None, 1, c_pad), lambda l, i, k: (l, 0, 0)),
        ],
        out_specs=pl.BlockSpec((tile, c_pad), lambda l, i, k: (i, 0)),
        scratch_shapes=[
            pltpu.VMEM((tile, c_pad), jnp.float32),        # per-row-tile accumulator
            pltpu.VMEM((2 * n_pad, c_pad), jnp.bfloat16),  # ping-pong activations
        ],
        compiler_params=pltpu.CompilerParams(
            # Layer and row axes carry dependencies through the shared activation
            # scratch (layer l+1 reads *all* rows of layer l) -> no megacore
            # parallel axis is legal for the fused kernel.
            dimension_semantics=("arbitrary", "arbitrary", "arbitrary"),
            vmem_limit_bytes=32 * 1024 * 1024,
        ),
    )(l_p, x_p, w_s, b_s)
    return out[:n, :out_dim]


def hgnn_reference(X, L, params):
    """Pure-JAX reference mirroring the kernel's bf16-operand / f32-accumulate math."""
    l_b = L.astype(jnp.bfloat16)
    h = X.astype(jnp.bfloat16)
    y = None
    n_layers = len(params)
    for idx, (w, b) in enumerate(params):
        t = jnp.dot(h, w.astype(jnp.bfloat16), preferred_element_type=jnp.float32) + b
        y = jnp.dot(l_b, t.astype(jnp.bfloat16), preferred_element_type=jnp.float32)
        if idx < n_layers - 1:
            h = jnp.maximum(y, 0.0).astype(jnp.bfloat16)
    return jax.nn.sigmoid(y)


def build_smoothing_matrix(H, edge_w):
    """Dense HGNN smoothing operator from incidence matrix H (N, E)."""
    H = H.astype(jnp.float32)
    d_v = H @ edge_w                      # vertex degrees (N,)
    d_e = jnp.sum(H, axis=0)              # hyperedge degrees (E,)
    inv_sqrt_dv = 1.0 / jnp.sqrt(d_v)
    inv_de = 1.0 / d_e
    # L = D_v^{-1/2} H W_e D_e^{-1} H^T D_v^{-1/2}
    HW = H * (edge_w * inv_de)[None, :]
    L = (inv_sqrt_dv[:, None] * HW) @ (H.T * inv_sqrt_dv[None, :])
    return L


def init_linear(key, cin, cout):
    """Deterministic Kaiming-uniform-like init (matches nn.Linear shapes)."""
    kw, kb = jax.random.split(key)
    bound = 1.0 / jnp.sqrt(jnp.float32(cin))
    W = jax.random.uniform(kw, (cin, cout), jnp.float32, -bound, bound)
    b = jax.random.uniform(kb, (1, cout), jnp.float32, -bound, bound)
    return W, b


if __name__ == "__main__":
    key = jax.random.PRNGKey(0)

    # Small but non-trivial shapes; N is deliberately NOT a multiple of the
    # 128-row tile so the padding path is exercised.
    N = 500            # number of vertices
    E = 64             # number of hyperedges
    C_IN = 32
    C_HID = 64
    NUM_CLASSES = 16
    NUM_CONV = 3       # layer dims: 32 -> 64 -> 64 -> 16

    k_x, k_h, k_p = jax.random.split(key, 3)

    # Vertex features.
    X = jax.random.normal(k_x, (N, C_IN), jnp.float32)

    # Synthetic hypergraph incidence matrix (N, E); every vertex/edge gets at
    # least one membership so all degrees are nonzero.
    H = (jax.random.uniform(k_h, (N, E)) < 0.1).astype(jnp.float32)
    rows = jnp.arange(N)
    H = H.at[rows, rows % E].set(1.0)
    edge_w = jnp.ones((E,), jnp.float32)
    L = build_smoothing_matrix(H, edge_w)

    # Layer parameters: in->hid, (num_conv-2) x hid->hid, hid->classes.
    dims = [C_IN] + [C_HID] * (NUM_CONV - 1) + [NUM_CLASSES]
    layer_keys = jax.random.split(k_p, len(dims) - 1)
    params = [init_linear(layer_keys[i], dims[i], dims[i + 1])
              for i in range(len(dims) - 1)]

    out = hgnn_forward(X, L, params)
    out = jax.block_until_ready(out)

    ref = hgnn_reference(X, L, params)

    assert out.shape == (N, NUM_CLASSES)
    err = float(jnp.max(jnp.abs(out - ref)))
    assert jnp.allclose(out, ref, atol=2e-3, rtol=2e-3), f"max |err| = {err}"
    print("KERNEL_OK")
</pallas_src>

<mosaic_0001>
module attributes {stable_mosaic.version = 11 : i64} {
  func.func @hgnn_fused_kernel(%arg0: i32, %arg1: i32, %arg2: i32, %arg3: memref<128x128xbf16, #tpu.memory_space<vmem>>, %arg4: memref<128x128xbf16, #tpu.memory_space<vmem>>, %arg5: memref<1x128x128xbf16, #tpu.memory_space<vmem>>, %arg6: memref<1x1x128xf32, #tpu.memory_space<vmem>>, %arg7: memref<128x128xf32, #tpu.memory_space<vmem>>, %arg8: memref<128x128xf32, #tpu.memory_space<vmem>>, %arg9: memref<1024x128xbf16, #tpu.memory_space<vmem>>) attributes {dimension_semantics = [#tpu.dimension_semantics<arbitrary>, #tpu.dimension_semantics<arbitrary>, #tpu.dimension_semantics<arbitrary>], iteration_bounds = array<i64: 3, 4, 4>, scalar_prefetch = 0 : i64, scratch_operands = 2 : i64, tpu.core_type = #tpu.core_type<tc>, window_params = [{transform_indices = @transform_0, window_bounds = array<i64: 128, 128>}, {transform_indices = @transform_1, window_bounds = array<i64: 128, 128>}, {transform_indices = @transform_2, window_bounds = array<i64: 1, 128, 128>}, {transform_indices = @transform_3, window_bounds = array<i64: 1, 1, 128>}, {transform_indices = @transform_4, window_bounds = array<i64: 128, 128>}]} {
    %c1_i32 = arith.constant 1 : i32
    %0 = arith.addi %arg0, %c1_i32 : i32
    %c1_i32_0 = arith.constant 1 : i32
    %1 = arith.andi %0, %c1_i32_0 : i32
    %c512_i32 = arith.constant 512 : i32
    %2 = arith.muli %1, %c512_i32 : i32
    %c1_i32_1 = arith.constant 1 : i32
    %3 = arith.andi %arg0, %c1_i32_1 : i32
    %c512_i32_2 = arith.constant 512 : i32
    %4 = arith.muli %3, %c512_i32_2 : i32
    %c0_i32 = arith.constant 0 : i32
    %5 = arith.cmpi eq, %arg0, %c0_i32 : i32
    %c0_i32_3 = arith.constant 0 : i32
    %6 = arith.cmpi eq, %arg1, %c0_i32_3 : i32
    %7 = arith.andi %5, %6 : i1
    %8 = arith.extui %7 : i1 to i32
    %c0_i32_4 = arith.constant 0 : i32
    %9 = arith.cmpi ne, %8, %c0_i32_4 : i32
    scf.if %9 {
      %c0_21 = arith.constant 0 : index
      %c0_22 = arith.constant 0 : index
      %34 = vector.load %arg4[%c0_21, %c0_22] : memref<128x128xbf16, #tpu.memory_space<vmem>>, vector<128x128xbf16>
      %c128_i32_23 = arith.constant 128 : i32
      %35 = arith.muli %arg2, %c128_i32_23 : i32
      %c512_i32_24 = arith.constant 512 : i32
      %36 = arith.addi %c512_i32_24, %35 : i32
      %37 = tpu.assume_multiple %36, 128 : i32
      %38 = arith.index_cast %37 : i32 to index
      %c0_25 = arith.constant 0 : index
      %39 = vector.load %arg9[%38, %c0_25] : memref<1024x128xbf16, #tpu.memory_space<vmem>>, vector<128x128xbf16>
      tpu.vector_store %arg9[%38, %c0_25], %34 {strides = array<i32>} : memref<1024x128xbf16, #tpu.memory_space<vmem>>, vector<128x128xbf16>,
    } else {
    }
    %c0_i32_5 = arith.constant 0 : i32
    %10 = arith.cmpi eq, %arg2, %c0_i32_5 : i32
    %11 = arith.extui %10 : i1 to i32
    %c0_i32_6 = arith.constant 0 : i32
    %12 = arith.cmpi ne, %11, %c0_i32_6 : i32
    scf.if %12 {
      %cst_21 = arith.constant 0.000000e+00 : f32
      %34 = vector.broadcast %cst_21 : f32 to vector<128x128xf32>
      %c0_22 = arith.constant 0 : index
      %c0_23 = arith.constant 0 : index
      %35 = vector.load %arg8[%c0_22, %c0_23] : memref<128x128xf32, #tpu.memory_space<vmem>>, vector<128x128xf32>
      tpu.vector_store %arg8[%c0_22, %c0_23], %34 {strides = array<i32>} : memref<128x128xf32, #tpu.memory_space<vmem>>, vector<128x128xf32>,
    } else {
    }
    %c128_i32 = arith.constant 128 : i32
    %13 = arith.muli %arg2, %c128_i32 : i32
    %14 = arith.addi %2, %13 : i32
    %15 = tpu.assume_multiple %14, 128 : i32
    %16 = arith.index_cast %15 : i32 to index
    %c0 = arith.constant 0 : index
    %17 = vector.load %arg9[%16, %c0] : memref<1024x128xbf16, #tpu.memory_space<vmem>>, vector<128x128xbf16>
    %c0_7 = arith.constant 0 : index
    %c0_8 = arith.constant 0 : index
    %c0_9 = arith.constant 0 : index
    %18 = vector.load %arg5[%c0_7, %c0_8, %c0_9] : memref<1x128x128xbf16, #tpu.memory_space<vmem>>, vector<1x128x128xbf16>
    %19 = vector.shape_cast %18 : vector<1x128x128xbf16> to vector<128x128xbf16>
    %cst = arith.constant dense<0.000000e+00> : vector<128x128xf32>
    %20 = tpu.matmul %17, %19, %cst {dimension_numbers = #tpu.dot_dimension_numbers<[1], [0], [0], [1], [0, 0, 1, 1], [], []>} : vector<128x128xbf16>, vector<128x128xbf16>, vector<128x128xf32> -> vector<128x128xf32>
    %c0_10 = arith.constant 0 : index
    %c0_11 = arith.constant 0 : index
    %c0_12 = arith.constant 0 : index
    %21 = vector.load %arg6[%c0_10, %c0_11, %c0_12] : memref<1x1x128xf32, #tpu.memory_space<vmem>>, vector<1x1x128xf32>
    %22 = vector.shape_cast %21 : vector<1x1x128xf32> to vector<1x128xf32>
    %23 = vector.broadcast %22 : vector<1x128xf32> to vector<128x128xf32>
    %24 = arith.addf %20, %23 : vector<128x128xf32>
    %c0_13 = arith.constant 0 : index
    %c0_14 = arith.constant 0 : index
    %25 = vector.load %arg8[%c0_13, %c0_14] : memref<128x128xf32, #tpu.memory_space<vmem>>, vector<128x128xf32>
    %c0_15 = arith.constant 0 : index
    %c0_16 = arith.constant 0 : index
    %26 = vector.load %arg3[%c0_15, %c0_16] : memref<128x128xbf16, #tpu.memory_space<vmem>>, vector<128x128xbf16>
    %27 = arith.truncf %24 : vector<128x128xf32> to vector<128x128xbf16>
    %cst_17 = arith.constant dense<0.000000e+00> : vector<128x128xf32>
    %28 = tpu.matmul %26, %27, %cst_17 {dimension_numbers = #tpu.dot_dimension_numbers<[1], [0], [0], [1], [0, 0, 1, 1], [], []>} : vector<128x128xbf16>, vector<128x128xbf16>, vector<128x128xf32> -> vector<128x128xf32>
    %29 = arith.addf %25, %28 : vector<128x128xf32>
    %c0_18 = arith.constant 0 : index
    %c0_19 = arith.constant 0 : index
    %30 = vector.load %arg8[%c0_18, %c0_19] : memref<128x128xf32, #tpu.memory_space<vmem>>, vector<128x128xf32>
    tpu.vector_store %arg8[%c0_18, %c0_19], %29 {strides = array<i32>} : memref<128x128xf32, #tpu.memory_space<vmem>>, vector<128x128xf32>,
    %c3_i32 = arith.constant 3 : i32
    %31 = arith.cmpi eq, %arg2, %c3_i32 : i32
    %32 = arith.extui %31 : i1 to i32
    %c0_i32_20 = arith.constant 0 : i32
    %33 = arith.cmpi ne, %32, %c0_i32_20 : i32
    scf.if %33 {
      %c0_21 = arith.constant 0 : index
      %c0_22 = arith.constant 0 : index
      %34 = vector.load %arg8[%c0_21, %c0_22] : memref<128x128xf32, #tpu.memory_space<vmem>>, vector<128x128xf32>
      %c2_i32 = arith.constant 2 : i32
      %35 = arith.cmpi slt, %arg0, %c2_i32 : i32
      %36 = arith.extui %35 : i1 to i32
      %c0_i32_23 = arith.constant 0 : i32
      %37 = arith.cmpi ne, %36, %c0_i32_23 : i32
      scf.if %37 {
        %cst_26 = arith.constant 0.000000e+00 : f32
        %41 = vector.broadcast %cst_26 : f32 to vector<128x128xf32>
        %42 = arith.maximumf %34, %41 : vector<128x128xf32>
        %43 = arith.truncf %42 : vector<128x128xf32> to vector<128x128xbf16>
        %c128_i32_27 = arith.constant 128 : i32
        %44 = arith.muli %arg1, %c128_i32_27 : i32
        %45 = arith.addi %4, %44 : i32
        %46 = tpu.assume_multiple %45, 128 : i32
        %47 = arith.index_cast %46 : i32 to index
        %c0_28 = arith.constant 0 : index
        %48 = vector.load %arg9[%47, %c0_28] : memref<1024x128xbf16, #tpu.memory_space<vmem>>, vector<128x128xbf16>
        tpu.vector_store %arg9[%47, %c0_28], %43 {strides = array<i32>} : memref<1024x128xbf16, #tpu.memory_space<vmem>>, vector<128x128xbf16>,
      } else {
      }
      %c2_i32_24 = arith.constant 2 : i32
      %38 = arith.cmpi eq, %arg0, %c2_i32_24 : i32
      %39 = arith.extui %38 : i1 to i32
      %c0_i32_25 = arith.constant 0 : i32
      %40 = arith.cmpi ne, %39, %c0_i32_25 : i32
      scf.if %40 {
        %41 = arith.negf %34 : vector<128x128xf32>
        %42 = math.exp %41 : vector<128x128xf32>
        %cst_26 = arith.constant 1.000000e+00 : f32
        %43 = vector.broadcast %cst_26 : f32 to vector<128x128xf32>
        %44 = arith.addf %43, %42 : vector<128x128xf32>
        %45 = arith.divf %43, %44 : vector<128x128xf32>
        %c0_27 = arith.constant 0 : index
        %c0_28 = arith.constant 0 : index
        %46 = vector.load %arg7[%c0_27, %c0_28] : memref<128x128xf32, #tpu.memory_space<vmem>>, vector<128x128xf32>
        tpu.vector_store %arg7[%c0_27, %c0_28], %45 {strides = array<i32>} : memref<128x128xf32, #tpu.memory_space<vmem>>, vector<128x128xf32>,
      } else {
      }
    } else {
    }
    return
  }
  func.func @transform_0(%arg0: i32, %arg1: i32, %arg2: i32) -> (i32, i32) {
    %c0_i32 = arith.constant 0 : i32
    return %arg1, %arg2 : i32, i32
  }
  func.func @transform_1(%arg0: i32, %arg1: i32, %arg2: i32) -> (i32, i32) {
    %c0_i32 = arith.constant 0 : i32
    %0 = arith.cmpi eq, %arg0, %c0_i32 : i32
    %c0_i32_0 = arith.constant 0 : i32
    %1 = arith.select %0, %arg2, %c0_i32_0 : i32
    %c0_i32_1 = arith.constant 0 : i32
    %c0_i32_2 = arith.constant 0 : i32
    return %1, %c0_i32_1 : i32, i32
  }
  func.func @transform_2(%arg0: i32, %arg1: i32, %arg2: i32) -> (i32, i32, i32) {
    %c0_i32 = arith.constant 0 : i32
    %c0_i32_0 = arith.constant 0 : i32
    %c0_i32_1 = arith.constant 0 : i32
    return %arg0, %c0_i32, %c0_i32_0 : i32, i32, i32
  }
  func.func @transform_3(%arg0: i32, %arg1: i32, %arg2: i32) -> (i32, i32, i32) {
    %c0_i32 = arith.constant 0 : i32
    %c0_i32_0 = arith.constant 0 : i32
    %c0_i32_1 = arith.constant 0 : i32
    return %arg0, %c0_i32, %c0_i32_0 : i32, i32, i32
  }
  func.func @transform_4(%arg0: i32, %arg1: i32, %arg2: i32) -> (i32, i32) {
    %c0_i32 = arith.constant 0 : i32
    %c0_i32_0 = arith.constant 0 : i32
    return %arg1, %c0_i32 : i32, i32
  }
}

</mosaic_0001>

<llo_original>
// kernel: tpu_custom_call.1
$region0: #{tpu_custom_call.1}
  #allocation0 [shape = 'u32[]', space=smem, size = 0x4, offset = 0x4, fixed_abs, tag = 'smem constant byte address 0x4 - core index']
  #allocation1 [shape = 'u32[144,128]{1,0:T(1,128)}', space=vmem, size = 0x12000, scoped, tag = 'internal scratch']
  #allocation2 [shape = 'f32[128,128]{1,0:T(8,128)}', space=vmem, size = 0x10000, scoped, tag = 'scratch operand']
  #allocation3 [shape = 'bf16[1024,128]{1,0:T(16,128)(2,1)}', space=vmem, size = 0x40000, scoped, tag = 'scratch operand']
  %s0 = inlined_call_operand.hbm [shape: bf16[512,512], index: 0, kind: input, shape index: {}]
  %s1 = inlined_call_operand.hbm [shape: bf16[512,128], index: 1, kind: input, shape index: {}]
  %s2 = inlined_call_operand.hbm [shape: bf16[3,128,128], index: 2, kind: input, shape index: {}]
  %s3 = inlined_call_operand.vmem [shape: f32[3,1,128], index: 3, kind: input, shape index: {}]
  %s4 = inlined_call_operand.hbm [shape: f32[512,128], index: 4, kind: output, shape index: {}]
  %s5 = sld [smem:[#allocation0]]
  $region81: #{tpu_custom_call.1} parent=0
    _
  %s7 = ssub.s32 1, %s5
  %s8 = scalar_select 0, %s7, %s5
  $region1: #{tpu_custom_call.1} parent=0
    #allocation4 [shape = 'u8[65536]{0}', space=vmem, size = 0x10000, scoped, tag = 'input window, operand 0']
    #allocation5 [shape = 's32[2]{0}', space=sflag, size = 0x8, scoped, tag = 'scoped memory for tpu_custom_call.1']
    #allocation6 [shape = 's32[2]{0}', space=sflag, size = 0x8, scoped, tag = 'scoped memory for tpu_custom_call.1']
    #allocation7 [shape = 'u8[65536]{0}', space=vmem, size = 0x10000, scoped, tag = 'input window, operand 1']
    #allocation8 [shape = 's32[2]{0}', space=sflag, size = 0x8, scoped, tag = 'scoped memory for tpu_custom_call.1']
    #allocation9 [shape = 'u8[65536]{0}', space=vmem, size = 0x10000, scoped, tag = 'input window, operand 2']
    #allocation10 [shape = 'u8[131072]{0}', space=vmem, size = 0x20000, scoped, tag = 'output window, operand 0']
    %9 = vsyncpa [#allocation5], 0
    %s10 = scalar_lea.sflag [#allocation5], 1
    %11 = vsyncpa %s10, 0
    %12 = vsyncpa [#allocation8], 0
    %s13 = scalar_lea.sflag [#allocation8], 1
    %14 = vsyncpa %s13, 0
    %15 = vsyncpa [#allocation6], 0
    %s16 = scalar_lea.sflag [#allocation6], 1
    %17 = vsyncpa %s16, 0
    loop: start=0, step=1, limit=50
    $region2: #{tpu_custom_call.1} parent=1 // loop_pre_header
      _
    $region3: #{tpu_custom_call.1} parent=1 // loop_header
      %s19 = sphi 0, %s23
      %p20 = scmp.ge.s32.totalorder %s19, 50
      %s26 = sphi 0, %s45
      %s27 = sphi 0, %s41
      %s28 = sphi 0, %s37
      %s29 = sphi 0, %s26
      %s30 = sphi 0, %s27
      %s31 = sphi 0, %s28
      %s32 = sphi 0, %s29
      %s33 = sphi 0, %s30
      %s34 = sphi 0, %s31
      %s50 = sphi 0, %s52
      %s53 = sphi 0, %s50
      %s54 = sphi 0, %s53
      %s70 = sphi 0, %s54
      %s80 = sphi 0, %s82
      %s83 = sphi 0, %s80
      %s84 = sphi 0, %s83
      %s100 = sphi 0, %s84
      %s106 = sphi 0, %s108
      %s109 = sphi 0, %s106
      %s110 = sphi 0, %s109
      %s126 = sphi 0, %s110
      %s132 = sphi 0, %s134
      %s135 = sphi 0, %s132
      %s136 = sphi 0, %s135
      %s152 = sphi 0, %s136
      %s158 = sphi 0, %s160
      %s161 = sphi 0, %s158
      %s162 = sphi 0, %s161
      %s178 = sphi 0, %s162
    $region4: #{tpu_custom_call.1} parent=1 // loop_header_branch
      %22 = sbr.rel (%p20) target = $region8
    $region5: #{tpu_custom_call.1} parent=1 // loop_body
      %s24 = ssub.s32 %s19, 1
      %s25 = ssub.s32 %s19, 2
      %s35 = sadd.s32 1, %s28
      %p36 = scmp.ge.s32.totalorder %s35, 4
      %s37 = scalar_select %p36, 0, %s35
      %s38 = sadd.s32 1, %s27
      %s39 = scalar_select %p36, %s38, %s27
      %p40 = scmp.ge.s32.totalorder %s39, 4
      %s41 = scalar_select %p40, 0, %s39
      %s42 = sadd.s32 1, %s26
      %s43 = scalar_select %p40, %s42, %s26
      %p44 = scmp.ge.s32.totalorder %s43, 3
      %s45 = scalar_select %p44, 0, %s43
      %s46 = ssub.s32 %s27, %s41
      %s47 = ssub.s32 %s28, %s37
      %s48 = sor.u32 %s46, %s47
      %p49 = scmp.eq.s32.totalorder %s48, 0
      %s51 = sadd.s32 %s50, 1
      %s52 = scalar_select %p49, %s50, %s51
      %p55 = pneg %p49
      %p56 = scmp.eq.s32.totalorder %s19, 47
      %p57 = por %p55, %p56
      %p58 = scmp.ne.s32.totalorder %s50, %s53
      %p59 = scmp.eq.s32.totalorder %s19, 0
      %p60 = por %p58, %p59
      %p61 = scmp.ne.s32.totalorder %s50, %s53
      %p62 = scmp.eq.s32.totalorder %s24, 47
      %p63 = por %p61, %p62
      %p64 = scmp.ne.s32.totalorder %s53, %s54
      %p65 = scmp.eq.s32.totalorder %s24, 0
      %p66 = por %p64, %p65
      %p67 = scmp.ne.s32.totalorder %s53, %s54
      %p68 = scmp.eq.s32.totalorder %s25, 47
      %p69 = por %p67, %p68
      %p71 = scmp.ne.s32.totalorder %s54, %s70
      %p72 = scmp.eq.s32.totalorder %s25, 0
      %p73 = por %p71, %p72
      %p74 = scmp.eq.s32.totalorder %s26, 0
      %s75 = scalar_select %p74, %s28, 0
      %p76 = scmp.eq.s32.totalorder %s45, 0
      %s77 = scalar_select %p76, %s37, 0
      %s78 = ssub.s32 %s75, %s77
      %p79 = scmp.eq.s32.totalorder %s78, 0
      %s81 = sadd.s32 %s80, 1
      %s82 = scalar_select %p79, %s80, %s81
      %p85 = pneg %p79
      %p86 = scmp.eq.s32.totalorder %s19, 47
      %p87 = por %p85, %p86
      %p88 = scmp.ne.s32.totalorder %s80, %s83
      %p89 = scmp.eq.s32.totalorder %s19, 0
      %p90 = por %p88, %p89
      %p91 = scmp.ne.s32.totalorder %s80, %s83
      %p92 = scmp.eq.s32.totalorder %s24, 47
      %p93 = por %p91, %p92
      %p94 = scmp.ne.s32.totalorder %s83, %s84
      %p95 = scmp.eq.s32.totalorder %s24, 0
      %p96 = por %p94, %p95
      %p97 = scmp.ne.s32.totalorder %s83, %s84
      %p98 = scmp.eq.s32.totalorder %s25, 47
      %p99 = por %p97, %p98
      %p101 = scmp.ne.s32.totalorder %s84, %s100
      %p102 = scmp.eq.s32.totalorder %s25, 0
      %p103 = por %p101, %p102
      %s104 = ssub.s32 %s26, %s45
      %p105 = scmp.eq.s32.totalorder %s104, 0
      %s107 = sadd.s32 %s106, 1
      %s108 = scalar_select %p105, %s106, %s107
      %p111 = pneg %p105
      %p112 = scmp.eq.s32.totalorder %s19, 47
      %p113 = por %p111, %p112
      %p114 = scmp.ne.s32.totalorder %s106, %s109
      %p115 = scmp.eq.s32.totalorder %s19, 0
      %p116 = por %p114, %p115
      %p117 = scmp.ne.s32.totalorder %s106, %s109
      %p118 = scmp.eq.s32.totalorder %s24, 47
      %p119 = por %p117, %p118
      %p120 = scmp.ne.s32.totalorder %s109, %s110
      %p121 = scmp.eq.s32.totalorder %s24, 0
      %p122 = por %p120, %p121
      %p123 = scmp.ne.s32.totalorder %s109, %s110
      %p124 = scmp.eq.s32.totalorder %s25, 47
      %p125 = por %p123, %p124
      %p127 = scmp.ne.s32.totalorder %s110, %s126
      %p128 = scmp.eq.s32.totalorder %s25, 0
      %p129 = por %p127, %p128
      %s130 = ssub.s32 %s26, %s45
      %p131 = scmp.eq.s32.totalorder %s130, 0
      %s133 = sadd.s32 %s132, 1
      %s134 = scalar_select %p131, %s132, %s133
      %p137 = pneg %p131
      %p138 = scmp.eq.s32.totalorder %s19, 47
      %p139 = por %p137, %p138
      %p140 = scmp.ne.s32.totalorder %s132, %s135
      %p141 = scmp.eq.s32.totalorder %s19, 0
      %p142 = por %p140, %p141
      %p143 = scmp.ne.s32.totalorder %s132, %s135
      %p144 = scmp.eq.s32.totalorder %s24, 47
      %p145 = por %p143, %p144
      %p146 = scmp.ne.s32.totalorder %s135, %s136
      %p147 = scmp.eq.s32.totalorder %s24, 0
      %p148 = por %p146, %p147
      %p149 = scmp.ne.s32.totalorder %s135, %s136
      %p150 = scmp.eq.s32.totalorder %s25, 47
      %p151 = por %p149, %p150
      %p153 = scmp.ne.s32.totalorder %s136, %s152
      %p154 = scmp.eq.s32.totalorder %s25, 0
      %p155 = por %p153, %p154
      %s156 = ssub.s32 %s27, %s41
      %p157 = scmp.eq.s32.totalorder %s156, 0
      %s159 = sadd.s32 %s158, 1
      %s160 = scalar_select %p157, %s158, %s159
      %p163 = pneg %p157
      %p164 = scmp.eq.s32.totalorder %s19, 47
      %p165 = por %p163, %p164
      %p166 = scmp.ne.s32.totalorder %s158, %s161
      %p167 = scmp.eq.s32.totalorder %s19, 0
      %p168 = por %p166, %p167
      %p169 = scmp.ne.s32.totalorder %s158, %s161
      %p170 = scmp.eq.s32.totalorder %s24, 47
      %p171 = por %p169, %p170
      %p172 = scmp.ne.s32.totalorder %s161, %s162
      %p173 = scmp.eq.s32.totalorder %s24, 0
      %p174 = por %p172, %p173
      %p175 = scmp.ne.s32.totalorder %s161, %s162
      %p176 = scmp.eq.s32.totalorder %s25, 47
      %p177 = por %p175, %p176
      %p179 = scmp.ne.s32.totalorder %s162, %s178
      %p180 = scmp.eq.s32.totalorder %s25, 0
      %p181 = por %p179, %p180
      %p182 = scmp.le.s32.totalorder 1, %s19
      %p183 = scmp.lt.s32.totalorder %s19, 49
      %p184 = pnand %p182, %p183
      %p185 = pneg %p184
      // Predicated region
      $region9: #{tpu_custom_call.1} parent=5 // pred_check
        _
      $region10: #{tpu_custom_call.1} parent=5 // pred_check_branch
        %187 = sbr.rel (%p184) target = $region12
      $region11: #{tpu_custom_call.1} parent=5 // pred_region
        %s188 = ssub.s32 %s19, 1
      $region12: #{tpu_custom_call.1} parent=5 // pred_fallthru
        _
      %p189 = scmp.lt.s32.totalorder %s19, 48
      // Predicated region
      $region13: #{tpu_custom_call.1} parent=5 // pred_check
        %p190 = pneg %p189
      $region14: #{tpu_custom_call.1} parent=5 // pred_check_branch
        %192 = sbr.rel (%p190) target = $region16
      $region15: #{tpu_custom_call.1} parent=5 // pred_region
        // Predicated region
        $region17: #{tpu_custom_call.1} parent=15 // pred_check
          %p193 = pneg %p60
        $region18: #{tpu_custom_call.1} parent=15 // pred_check_branch
          %195 = sbr.rel (%p193) target = $region20
        $region19: #{tpu_custom_call.1} parent=15 // pred_region
          %s196 = sand.u32 %s50, 1
          %s197 = scalar_lea.sflag [#allocation5], %s196
          %s198 = sand.u32 %s50, 1
          %s199 = smul.addr %s198, 64
          %s200 = scalar_lea.vmem [#allocation4], %s199
          %s201 = smul.u32 16, %s27
          %s203 = ssub.s32 1024, 1024
          %204 = vsyncadd %s197, %s203
          %s205 = smul.addr %s201, 4
          %s206 = sadd.s32 %s28, %s205
          %s207 = smul.addr %s206, 64
          %s208 = scalar_lea.hbm %s0, %s207
          %s209 = sshll.u32 %s200, 4
          %s210 = int_to_ptr.vmem [resolvable:$true] %s209
          %215 = dma.hbm_to_vmem [thread:$0]  %s208, 1024, %s210, %s197, 256, 64, 4
        $region20: #{tpu_custom_call.1} parent=15 // pred_fallthru
          _
        // Predicated region
        $region21: #{tpu_custom_call.1} parent=15 // pred_check
          %p216 = pneg %p90
        $region22: #{tpu_custom_call.1} parent=15 // pred_check_branch
          %218 = sbr.rel (%p216) target = $region24
        $region23: #{tpu_custom_call.1} parent=15 // pred_region
          %s219 = sand.u32 %s19, 1
          %s220 = scalar_lea.sflag [#allocation8], %s219
          %s221 = sand.u32 %s80, 1
          %s222 = smul.addr %s221, 64
          %s223 = scalar_lea.vmem [#allocation7], %s222
          %p224 = scmp.eq.s32.totalorder %s26, 0
          %s225 = scalar_select %p224, %s28, 0
          %s226 = smul.u32 16, %s225
          %s228 = ssub.s32 1024, 1024
          %229 = vsyncadd %s220, %s228
          %s230 = smul.addr %s226, 64
          %s231 = scalar_lea.hbm %s1, %s230
          %s232 = sshll.u32 %s223, 4
          %s233 = int_to_ptr.vmem [resolvable:$true] %s232
          %238 = dma.hbm_to_vmem [thread:$0]  %s231, 1024, %s233, %s220, 64, 64, 4
        $region24: #{tpu_custom_call.1} parent=15 // pred_fallthru
          _
        // Predicated region
        $region25: #{tpu_custom_call.1} parent=15 // pred_check
          %p239 = pneg %p116
        $region26: #{tpu_custom_call.1} parent=15 // pred_check_branch
          %241 = sbr.rel (%p239) target = $region28
        $region27: #{tpu_custom_call.1} parent=15 // pred_region
          %s242 = sand.u32 %s19, 1
          %s243 = scalar_lea.sflag [#allocation8], %s242
          %s244 = sand.u32 %s106, 1
          %s245 = smul.addr %s244, 64
          %s246 = scalar_lea.vmem [#allocation9], %s245
          %s248 = ssub.s32 1024, 1024
          %249 = vsyncadd %s243, %s248
          %s250 = smul.addr %s26, 16
          %s251 = smul.addr %s250, 64
          %s252 = scalar_lea.hbm %s2, %s251
          %s253 = sshll.u32 %s246, 4
          %s254 = int_to_ptr.vmem [resolvable:$true] %s253
          %259 = dma.hbm_to_vmem [thread:$0]  %s252, 1024, %s254, %s243, 64, 64, 4
        $region28: #{tpu_custom_call.1} parent=15 // pred_fallthru
          _
        // Predicated region
        $region29: #{tpu_custom_call.1} parent=15 // pred_check
          %p260 = pneg %p142
        $region30: #{tpu_custom_call.1} parent=15 // pred_check_branch
          %262 = sbr.rel (%p260) target = $region32
        $region31: #{tpu_custom_call.1} parent=15 // pred_region
          %p263 = scmp.lt.s32.totalorder %s26, 2
          %s264 = scalar_select %p263, %s26, 2
          %s265 = scalar_lea.vmem %s3, %s264
        $region32: #{tpu_custom_call.1} parent=15 // pred_fallthru
          _
      $region16: #{tpu_custom_call.1} parent=5 // pred_fallthru
        _
      %p266 = scmp.le.s32.totalorder 1, %s19
      %p267 = scmp.lt.s32.totalorder %s19, 49
      %p268 = pnand %p266, %p267
      %p269 = pneg %p268
      // Predicated region
      $region33: #{tpu_custom_call.1} parent=5 // pred_check
        _
      $region34: #{tpu_custom_call.1} parent=5 // pred_check_branch
        %271 = sbr.rel (%p268) target = $region36
      $region35: #{tpu_custom_call.1} parent=5 // pred_region
        %s272 = ssub.s32 %s19, 1
        %s273 = sand.u32 %s53, 1
        %s274 = scalar_lea.sflag [#allocation5], %s273
        %s275 = sand.u32 %s53, 1
        %s276 = smul.addr %s275, 64
        %s277 = scalar_lea.vmem [#allocation4], %s276
        // Predicated region
        $region37: #{tpu_custom_call.1} parent=35 // pred_check
          %p278 = pneg %p66
        $region38: #{tpu_custom_call.1} parent=35 // pred_check_branch
          %280 = sbr.rel (%p278) target = $region40
        $region39: #{tpu_custom_call.1} parent=35 // pred_region
          %281 = dma.done %s274, 1024
        $region40: #{tpu_custom_call.1} parent=35 // pred_fallthru
          _
        %s282 = sand.u32 %s24, 1
        %s283 = scalar_lea.sflag [#allocation8], %s282
        %s284 = sand.u32 %s83, 1
        %s285 = smul.addr %s284, 64
        %s286 = scalar_lea.vmem [#allocation7], %s285
        // Predicated region
        $region41: #{tpu_custom_call.1} parent=35 // pred_check
          %p287 = pneg %p96
        $region42: #{tpu_custom_call.1} parent=35 // pred_check_branch
          %289 = sbr.rel (%p287) target = $region44
        $region43: #{tpu_custom_call.1} parent=35 // pred_region
          %290 = dma.done %s283, 1024
        $region44: #{tpu_custom_call.1} parent=35 // pred_fallthru
          _
        %s291 = sand.u32 %s24, 1
        %s292 = scalar_lea.sflag [#allocation8], %s291
        %s293 = sand.u32 %s109, 1
        %s294 = smul.addr %s293, 64
        %s295 = scalar_lea.vmem [#allocation9], %s294
        // Predicated region
        $region45: #{tpu_custom_call.1} parent=35 // pred_check
          %p296 = pneg %p122
        $region46: #{tpu_custom_call.1} parent=35 // pred_check_branch
          %298 = sbr.rel (%p296) target = $region48
        $region47: #{tpu_custom_call.1} parent=35 // pred_region
          %299 = dma.done %s292, 1024
        $region48: #{tpu_custom_call.1} parent=35 // pred_fallthru
          _
        %s300 = sand.u32 %s53, 1
        %s301 = scalar_lea.sflag [#allocation5], %s300
        %s302 = sand.u32 %s53, 1
        %s303 = smul.addr %s302, 64
        %s304 = scalar_lea.vmem [#allocation4], %s303
        %p305 = pneg %p66
        %p306 = pneg %p63
        %s307 = sand.u32 %s24, 1
        %s308 = scalar_lea.sflag [#allocation8], %s307
        %s309 = sand.u32 %s83, 1
        %s310 = smul.addr %s309, 64
        %s311 = scalar_lea.vmem [#allocation7], %s310
        %p312 = pneg %p96
        %p313 = pneg %p93
        %s314 = sand.u32 %s24, 1
        %s315 = scalar_lea.sflag [#allocation8], %s314
        %s316 = sand.u32 %s109, 1
        %s317 = smul.addr %s316, 64
        %s318 = scalar_lea.vmem [#allocation9], %s317
        %p319 = pneg %p122
        %p320 = pneg %p119
        %p321 = scmp.lt.s32.totalorder %s29, 2
        %s322 = scalar_select %p321, %s29, 2
        %s323 = scalar_lea.vmem %s3, %s322
        %p324 = pneg %p148
        %p325 = pneg %p145
        %p326 = pneg %p174
        %p327 = pneg %p171
        %s328 = sand.u32 %s161, 1
        %s329 = scalar_lea.sflag [#allocation6], %s328
        %s330 = sand.u32 %s161, 1
        %s331 = smul.addr %s330, 128
        %s332 = scalar_lea.vmem [#allocation10], %s331
        %s333 = smul.u32 16, %s30
        %p334 = scmp.eq.s32.totalorder %s29, 0
        %s335 = scalar_select %p334, %s31, 0
        %s336 = smul.u32 16, %s335
        %p337 = scmp.lt.s32.totalorder %s29, 2
        %s338 = scalar_select %p337, %s29, 2
        %s339 = scalar_lea.vmem %s3, %s338
        %s340 = smul.u32 16, %s30
        %s342 = sadd.s32 %s29, 1
        %s343 = sand.u32 %s342, 1
        %s344 = smul.u32 %s343, 512
        %s345 = sand.u32 %s29, 1
        %s346 = smul.u32 %s345, 512
        %p347 = scmp.eq.s32.totalorder %s29, 0
        %p348 = scmp.eq.s32.totalorder %s30, 0
        %p349 = pnand %p347, %p348
        %p350 = pneg %p349
        // Predicated region
        $region49: #{tpu_custom_call.1} parent=35 // pred_check
          _
        $region50: #{tpu_custom_call.1} parent=35 // pred_check_branch
          %352 = sbr.rel (%p349) target = $region52
        $region51: #{tpu_custom_call.1} parent=35 // pred_region
          %v353 = vld [vmem:[%s286] sm:$0xf]
          %v354 = vld [vmem:[%s286 + $0x4] sm:$0xf]
          %v355 = vld [vmem:[%s286 + $0x8] sm:$0xf]
          %v356 = vld [vmem:[%s286 + $0xc] sm:$0xf]
          %v357 = vld [vmem:[%s286 + $0x10] sm:$0xf]
          %v358 = vld [vmem:[%s286 + $0x14] sm:$0xf]
          %v359 = vld [vmem:[%s286 + $0x18] sm:$0xf]
          %v360 = vld [vmem:[%s286 + $0x1c] sm:$0xf]
          %v361 = vld [vmem:[%s286 + $0x20] sm:$0xf]
          %v362 = vld [vmem:[%s286 + $0x24] sm:$0xf]
          %v363 = vld [vmem:[%s286 + $0x28] sm:$0xf]
          %v364 = vld [vmem:[%s286 + $0x2c] sm:$0xf]
          %v365 = vld [vmem:[%s286 + $0x30] sm:$0xf]
          %v366 = vld [vmem:[%s286 + $0x34] sm:$0xf]
          %v367 = vld [vmem:[%s286 + $0x38] sm:$0xf]
          %v368 = vld [vmem:[%s286 + $0x3c] sm:$0xf]
          %s369 = smul.u32 %s31, 128
          %s370 = sadd.s32 %s369, 512
          %v387 = vunpack.c.l.b16 %v353
          %v388 = vunpack.c.l.b16 %v354
          %v389 = vunpack.c.l.b16 %v355
          %v390 = vunpack.c.l.b16 %v356
          %v391 = vunpack.c.l.b16 %v357
          %v392 = vunpack.c.l.b16 %v358
          %v393 = vunpack.c.l.b16 %v359
          %v394 = vunpack.c.l.b16 %v360
          %v395 = vunpack.c.l.b16 %v361
          %v396 = vunpack.c.l.b16 %v362
          %v397 = vunpack.c.l.b16 %v363
          %v398 = vunpack.c.l.b16 %v364
          %v399 = vunpack.c.l.b16 %v365
          %v400 = vunpack.c.l.b16 %v366
          %v401 = vunpack.c.l.b16 %v367
          %v402 = vunpack.c.l.b16 %v368
          %v403 = vpack.c.b16 %v388, %v387
          %v404 = vpack.c.b16 %v390, %v389
          %v405 = vpack.c.b16 %v392, %v391
          %v406 = vpack.c.b16 %v394, %v393
          %v407 = vpack.c.b16 %v396, %v395
          %v408 = vpack.c.b16 %v398, %v397
          %v409 = vpack.c.b16 %v400, %v399
          %v410 = vpack.c.b16 %v402, %v401
          %s419 = sshra.s32 %s370, 4
          %s420 = sand.u32 %s370, 15
          %s421 = smul.addr %s419, 8
          %s422 = scalar_lea.vmem [#allocation3], %s421
          %423 = vst [vmem:[%s422] sm:$0xff] %v403
          %424 = vst [vmem:[%s422 + $0x8] sm:$0xff] %v404
          %425 = vst [vmem:[%s422 + $0x10] sm:$0xff] %v405
          %426 = vst [vmem:[%s422 + $0x18] sm:$0xff] %v406
          %427 = vst [vmem:[%s422 + $0x20] sm:$0xff] %v407
          %428 = vst [vmem:[%s422 + $0x28] sm:$0xff] %v408
          %429 = vst [vmem:[%s422 + $0x30] sm:$0xff] %v409
          %430 = vst [vmem:[%s422 + $0x38] sm:$0xff] %v410
        $region52: #{tpu_custom_call.1} parent=35 // pred_fallthru
          _
        %p431 = scmp.eq.s32.totalorder %s31, 0
        // Predicated region
        $region53: #{tpu_custom_call.1} parent=35 // pred_check
          %p432 = pneg %p431
        $region54: #{tpu_custom_call.1} parent=35 // pred_check_branch
          %434 = sbr.rel (%p432) target = $region56
        $region55: #{tpu_custom_call.1} parent=35 // pred_region
          %435 = vst [vmem:[#allocation2] sm:$0xff] 0.0
          %436 = vst [vmem:[#allocation2 + $0x8] sm:$0xff] 0.0
          %437 = vst [vmem:[#allocation2 + $0x10] sm:$0xff] 0.0
          %438 = vst [vmem:[#allocation2 + $0x18] sm:$0xff] 0.0
          %439 = vst [vmem:[#allocation2 + $0x20] sm:$0xff] 0.0
          %440 = vst [vmem:[#allocation2 + $0x28] sm:$0xff] 0.0
          %441 = vst [vmem:[#allocation2 + $0x30] sm:$0xff] 0.0
          %442 = vst [vmem:[#allocation2 + $0x38] sm:$0xff] 0.0
          %443 = vst [vmem:[#allocation2 + $0x40] sm:$0xff] 0.0
          %444 = vst [vmem:[#allocation2 + $0x48] sm:$0xff] 0.0
          %445 = vst [vmem:[#allocation2 + $0x50] sm:$0xff] 0.0
          %446 = vst [vmem:[#allocation2 + $0x58] sm:$0xff] 0.0
          %447 = vst [vmem:[#allocation2 + $0x60] sm:$0xff] 0.0
          %448 = vst [vmem:[#allocation2 + $0x68] sm:$0xff] 0.0
          %449 = vst [vmem:[#allocation2 + $0x70] sm:$0xff] 0.0
          %450 = vst [vmem:[#allocation2 + $0x78] sm:$0xff] 0.0
        $region56: #{tpu_custom_call.1} parent=35 // pred_fallthru
          _
        %s451 = smul.u32 %s31, 128
        %s452 = sadd.s32 %s344, %s451
        %s453 = sshra.s32 %s452, 4
        %s454 = sand.u32 %s452, 15
        %s455 = smul.addr %s453, 8
        %s456 = scalar_lea.vmem [#allocation3], %s455
        %v457 = vld [vmem:[%s456] sm:$0xff]
        %v458 = vld [vmem:[%s456 + $0x8] sm:$0xff]
        %v459 = vld [vmem:[%s456 + $0x10] sm:$0xff]
        %v460 = vld [vmem:[%s456 + $0x18] sm:$0xff]
        %v461 = vld [vmem:[%s456 + $0x20] sm:$0xff]
        %v462 = vld [vmem:[%s456 + $0x28] sm:$0xff]
        %v463 = vld [vmem:[%s456 + $0x30] sm:$0xff]
        %v464 = vld [vmem:[%s456 + $0x38] sm:$0xff]
        %v465 = vld [vmem:[%s295] sm:$0xf]
        %v466 = vld [vmem:[%s295 + $0x4] sm:$0xf]
        %v467 = vld [vmem:[%s295 + $0x8] sm:$0xf]
        %v468 = vld [vmem:[%s295 + $0xc] sm:$0xf]
        %v469 = vld [vmem:[%s295 + $0x10] sm:$0xf]
        %v470 = vld [vmem:[%s295 + $0x14] sm:$0xf]
        %v471 = vld [vmem:[%s295 + $0x18] sm:$0xf]
        %v472 = vld [vmem:[%s295 + $0x1c] sm:$0xf]
        %v473 = vld [vmem:[%s295 + $0x20] sm:$0xf]
        %v474 = vld [vmem:[%s295 + $0x24] sm:$0xf]
        %v475 = vld [vmem:[%s295 + $0x28] sm:$0xf]
        %v476 = vld [vmem:[%s295 + $0x2c] sm:$0xf]
        %v477 = vld [vmem:[%s295 + $0x30] sm:$0xf]
        %v478 = vld [vmem:[%s295 + $0x34] sm:$0xf]
        %v479 = vld [vmem:[%s295 + $0x38] sm:$0xf]
        %v480 = vld [vmem:[%s295 + $0x3c] sm:$0xf]
        %v481 = vld [vmem:[%s339] sm:$0x1]
        %v483 = vlaneseq
        %v484 = vshrl.u32 %v483, 7
        %v485 = vsub.s32 0, %v484
        %v486 = vrot.slane %v481, %v485
        %v504 = vunpack.c.l.b16 %v465
        %v505 = vunpack.c.l.b16 %v466
        %v506 = vunpack.c.l.b16 %v467
        %v507 = vunpack.c.l.b16 %v468
        %v508 = vunpack.c.l.b16 %v469
        %v509 = vunpack.c.l.b16 %v470
        %v510 = vunpack.c.l.b16 %v471
        %v511 = vunpack.c.l.b16 %v472
        %v512 = vunpack.c.l.b16 %v473
        %v513 = vunpack.c.l.b16 %v474
        %v514 = vunpack.c.l.b16 %v475
        %v515 = vunpack.c.l.b16 %v476
        %v516 = vunpack.c.l.b16 %v477
        %v517 = vunpack.c.l.b16 %v478
        %v518 = vunpack.c.l.b16 %v479
        %v519 = vunpack.c.l.b16 %v480
        %v520 = vpack.c.b16 %v505, %v504
        %v521 = vpack.c.b16 %v507, %v506
        %v522 = vpack.c.b16 %v509, %v508
        %v523 = vpack.c.b16 %v511, %v510
        %v524 = vpack.c.b16 %v513, %v512
        %v525 = vpack.c.b16 %v515, %v514
        %v526 = vpack.c.b16 %v517, %v516
        %v527 = vpack.c.b16 %v519, %v518
        %536 = vmatprep.subr.bf16.mxu0 0
        %537 = vmatpush1.bf16.msra.mxu0 %v520
        %538 = vmatprep.subr.bf16.mxu0 0
        %539 = vmatpush1.bf16.msra.mxu0 %v521
        %540 = vmatprep.subr.bf16.mxu0 0
        %541 = vmatpush1.bf16.msra.mxu0 %v522
        %542 = vmatprep.subr.bf16.mxu0 0
        %543 = vmatpush1.bf16.msra.mxu0 %v523
        %544 = vmatprep.subr.bf16.mxu0 0
        %545 = vmatpush1.bf16.msra.mxu0 %v524
        %546 = vmatprep.subr.bf16.mxu0 0
        %547 = vmatpush1.bf16.msra.mxu0 %v525
        %548 = vmatprep.subr.bf16.mxu0 0
        %549 = vmatpush1.bf16.msra.mxu0 %v526
        %550 = vmatprep.subr.bf16.mxu0 0
        %551 = vmatpush1.bf16.msra.mxu0 %v527
        %552 = vmatprep.subr.bf16.mxu0 0
        %553 = vmatpush1.bf16.msra.mxu0 0
        %554 = vmatprep.subr.bf16.mxu0 0
        %555 = vmatpush1.bf16.msra.mxu0 0
        %556 = vmatprep.subr.bf16.mxu0 0
        %557 = vmatpush1.bf16.msra.mxu0 0
        %558 = vmatprep.subr.bf16.mxu0 0
        %559 = vmatpush1.bf16.msra.mxu0 0
        %560 = vmatprep.subr.bf16.mxu0 0
        %561 = vmatpush1.bf16.msra.mxu0 0
        %562 = vmatprep.subr.bf16.mxu0 0
        %563 = vmatpush1.bf16.msra.mxu0 0
        %564 = vmatprep.subr.bf16.mxu0 0
        %565 = vmatpush1.bf16.msra.mxu0 0
        %566 = vmatprep.subr.bf16.mxu0 0
        %567 = vmatpush1.bf16.msra.mxu0 0
        %568 = vmatprep.mubr.bf16.mxu0 0
        %569 = vmatmul.mubr.bf16.gmra.mrb[0].mxu0 %v457
        %v570 = vpop.f32.mrb[0].mxu0
        %v571 = vadd.f32 %v486, %v570
        %v572 = vpop.f32.mrb[0].mxu0
        %v573 = vpop.f32.mrb[0].mxu0
        %v574 = vadd.f32 %v486, %v573
        %v575 = vpop.f32.mrb[0].mxu0
        %576 = vmatprep.mubr.bf16.mxu0 0
        %577 = vmatmul.mubr.bf16.gmra.mrb[0].mxu0 %v458
        %v578 = vpop.f32.mrb[0].mxu0
        %v579 = vadd.f32 %v486, %v578
        %v580 = vpop.f32.mrb[0].mxu0
        %v581 = vpop.f32.mrb[0].mxu0
        %v582 = vadd.f32 %v486, %v581
        %v583 = vpop.f32.mrb[0].mxu0
        %584 = vmatprep.mubr.bf16.mxu0 0
        %585 = vmatmul.mubr.bf16.gmra.mrb[0].mxu0 %v459
        %v586 = vpop.f32.mrb[0].mxu0
        %v587 = vadd.f32 %v486, %v586
        %v588 = vpop.f32.mrb[0].mxu0
        %v589 = vpop.f32.mrb[0].mxu0
        %v590 = vadd.f32 %v486, %v589
        %v591 = vpop.f32.mrb[0].mxu0
        %592 = vmatprep.mubr.bf16.mxu0 0
        %593 = vmatmul.mubr.bf16.gmra.mrb[0].mxu0 %v460
        %v594 = vpop.f32.mrb[0].mxu0
        %v595 = vadd.f32 %v486, %v594
        %v596 = vpop.f32.mrb[0].mxu0
        %v597 = vpop.f32.mrb[0].mxu0
        %v598 = vadd.f32 %v486, %v597
        %v599 = vpop.f32.mrb[0].mxu0
        %600 = vmatprep.mubr.bf16.mxu0 0
        %601 = vmatmul.mubr.bf16.gmra.mrb[0].mxu0 %v461
        %v602 = vpop.f32.mrb[0].mxu0
        %v603 = vadd.f32 %v486, %v602
        %v604 = vpop.f32.mrb[0].mxu0
        %v605 = vpop.f32.mrb[0].mxu0
        %v606 = vadd.f32 %v486, %v605
        %v607 = vpop.f32.mrb[0].mxu0
        %608 = vmatprep.mubr.bf16.mxu0 0
        %609 = vmatmul.mubr.bf16.gmra.mrb[0].mxu0 %v462
        %v610 = vpop.f32.mrb[0].mxu0
        %v611 = vadd.f32 %v486, %v610
        %v612 = vpop.f32.mrb[0].mxu0
        %v613 = vpop.f32.mrb[0].mxu0
        %v614 = vadd.f32 %v486, %v613
        %v615 = vpop.f32.mrb[0].mxu0
        %616 = vmatprep.mubr.bf16.mxu0 0
        %617 = vmatmul.mubr.bf16.gmra.mrb[0].mxu0 %v463
        %v618 = vpop.f32.mrb[0].mxu0
        %v619 = vadd.f32 %v486, %v618
        %v620 = vpop.f32.mrb[0].mxu0
        %v621 = vpop.f32.mrb[0].mxu0
        %v622 = vadd.f32 %v486, %v621
        %v623 = vpop.f32.mrb[0].mxu0
        %624 = vmatprep.mubr.bf16.mxu0 0
        %625 = vmatmul.mubr.bf16.gmra.mrb[0].mxu0 %v464
        %v626 = vpop.f32.mrb[0].mxu0
        %v627 = vadd.f32 %v486, %v626
        %v628 = vpop.f32.mrb[0].mxu0
        %v629 = vpop.f32.mrb[0].mxu0
        %v630 = vadd.f32 %v486, %v629
        %v631 = vpop.f32.mrb[0].mxu0
        %632 = vdwg.mxu0
        %v633 = vld [vmem:[#allocation2] sm:$0xff]
        %v634 = vld [vmem:[#allocation2 + $0x8] sm:$0xff]
        %v635 = vld [vmem:[#allocation2 + $0x10] sm:$0xff]
        %v636 = vld [vmem:[#allocation2 + $0x18] sm:$0xff]
        %v637 = vld [vmem:[#allocation2 + $0x20] sm:$0xff]
        %v638 = vld [vmem:[#allocation2 + $0x28] sm:$0xff]
        %v639 = vld [vmem:[#allocation2 + $0x30] sm:$0xff]
        %v640 = vld [vmem:[#allocation2 + $0x38] sm:$0xff]
        %v641 = vld [vmem:[#allocation2 + $0x40] sm:$0xff]
        %v642 = vld [vmem:[#allocation2 + $0x48] sm:$0xff]
        %v643 = vld [vmem:[#allocation2 + $0x50] sm:$0xff]
        %v644 = vld [vmem:[#allocation2 + $0x58] sm:$0xff]
        %v645 = vld [vmem:[#allocation2 + $0x60] sm:$0xff]
        %v646 = vld [vmem:[#allocation2 + $0x68] sm:$0xff]
        %v647 = vld [vmem:[#allocation2 + $0x70] sm:$0xff]
        %v648 = vld [vmem:[#allocation2 + $0x78] sm:$0xff]
        %v649 = vld [vmem:[%s277] sm:$0xf]
        %v650 = vld [vmem:[%s277 + $0x4] sm:$0xf]
        %v651 = vld [vmem:[%s277 + $0x8] sm:$0xf]
        %v652 = vld [vmem:[%s277 + $0xc] sm:$0xf]
        %v653 = vld [vmem:[%s277 + $0x10] sm:$0xf]
        %v654 = vld [vmem:[%s277 + $0x14] sm:$0xf]
        %v655 = vld [vmem:[%s277 + $0x18] sm:$0xf]
        %v656 = vld [vmem:[%s277 + $0x1c] sm:$0xf]
        %v657 = vld [vmem:[%s277 + $0x20] sm:$0xf]
        %v658 = vld [vmem:[%s277 + $0x24] sm:$0xf]
        %v659 = vld [vmem:[%s277 + $0x28] sm:$0xf]
        %v660 = vld [vmem:[%s277 + $0x2c] sm:$0xf]
        %v661 = vld [vmem:[%s277 + $0x30] sm:$0xf]
        %v662 = vld [vmem:[%s277 + $0x34] sm:$0xf]
        %v663 = vld [vmem:[%s277 + $0x38] sm:$0xf]
        %v664 = vld [vmem:[%s277 + $0x3c] sm:$0xf]
        %v665 = vpack.c.bf16 %v574, %v571
        %v666 = vpack.c.bf16 %v582, %v579
        %v667 = vpack.c.bf16 %v590, %v587
        %v668 = vpack.c.bf16 %v598, %v595
        %v669 = vpack.c.bf16 %v606, %v603
        %v670 = vpack.c.bf16 %v614, %v611
        %v671 = vpack.c.bf16 %v622, %v619
        %v672 = vpack.c.bf16 %v630, %v627
        %v689 = vunpack.c.l.b16 %v649
        %v690 = vunpack.c.l.b16 %v650
        %v691 = vunpack.c.l.b16 %v651
        %v692 = vunpack.c.l.b16 %v652
        %v693 = vunpack.c.l.b16 %v653
        %v694 = vunpack.c.l.b16 %v654
        %v695 = vunpack.c.l.b16 %v655
        %v696 = vunpack.c.l.b16 %v656
        %v697 = vunpack.c.l.b16 %v657
        %v698 = vunpack.c.l.b16 %v658
        %v699 = vunpack.c.l.b16 %v659
        %v700 = vunpack.c.l.b16 %v660
        %v701 = vunpack.c.l.b16 %v661
        %v702 = vunpack.c.l.b16 %v662
        %v703 = vunpack.c.l.b16 %v663
        %v704 = vunpack.c.l.b16 %v664
        %v705 = vpack.c.b16 %v690, %v689
        %v706 = vpack.c.b16 %v692, %v691
        %v707 = vpack.c.b16 %v694, %v693
        %v708 = vpack.c.b16 %v696, %v695
        %v709 = vpack.c.b16 %v698, %v697
        %v710 = vpack.c.b16 %v700, %v699
        %v711 = vpack.c.b16 %v702, %v701
        %v712 = vpack.c.b16 %v704, %v703
        %721 = vmatprep.subr.bf16.mxu0 0
        %722 = vmatpush1.bf16.msra.mxu0 %v665
        %723 = vmatprep.subr.bf16.mxu0 0
        %724 = vmatpush1.bf16.msra.mxu0 %v666
        %725 = vmatprep.subr.bf16.mxu0 0
        %726 = vmatpush1.bf16.msra.mxu0 %v667
        %727 = vmatprep.subr.bf16.mxu0 0
        %728 = vmatpush1.bf16.msra.mxu0 %v668
        %729 = vmatprep.subr.bf16.mxu0 0
        %730 = vmatpush1.bf16.msra.mxu0 %v669
        %731 = vmatprep.subr.bf16.mxu0 0
        %732 = vmatpush1.bf16.msra.mxu0 %v670
        %733 = vmatprep.subr.bf16.mxu0 0
        %734 = vmatpush1.bf16.msra.mxu0 %v671
        %735 = vmatprep.subr.bf16.mxu0 0
        %736 = vmatpush1.bf16.msra.mxu0 %v672
        %737 = vmatprep.subr.bf16.mxu0 0
        %738 = vmatpush1.bf16.msra.mxu0 0
        %739 = vmatprep.subr.bf16.mxu0 0
        %740 = vmatpush1.bf16.msra.mxu0 0
        %741 = vmatprep.subr.bf16.mxu0 0
        %742 = vmatpush1.bf16.msra.mxu0 0
        %743 = vmatprep.subr.bf16.mxu0 0
        %744 = vmatpush1.bf16.msra.mxu0 0
        %745 = vmatprep.subr.bf16.mxu0 0
        %746 = vmatpush1.bf16.msra.mxu0 0
        %747 = vmatprep.subr.bf16.mxu0 0
        %748 = vmatpush1.bf16.msra.mxu0 0
        %749 = vmatprep.subr.bf16.mxu0 0
        %750 = vmatpush1.bf16.msra.mxu0 0
        %751 = vmatprep.subr.bf16.mxu0 0
        %752 = vmatpush1.bf16.msra.mxu0 0
        %753 = vmatprep.mubr.bf16.mxu0 0
        %754 = vmatmul.mubr.bf16.gmra.mrb[0].mxu0 %v705
        %v755 = vpop.f32.mrb[0].mxu0
        %v756 = vadd.f32 0.0, %v755
        %v757 = vpop.f32.mrb[0].mxu0
        %v758 = vpop.f32.mrb[0].mxu0
        %v759 = vadd.f32 0.0, %v758
        %v760 = vpop.f32.mrb[0].mxu0
        %761 = vmatprep.mubr.bf16.mxu0 0
        %762 = vmatmul.mubr.bf16.gmra.mrb[0].mxu0 %v706
        %v763 = vpop.f32.mrb[0].mxu0
        %v764 = vadd.f32 0.0, %v763
        %v765 = vpop.f32.mrb[0].mxu0
        %v766 = vpop.f32.mrb[0].mxu0
        %v767 = vadd.f32 0.0, %v766
        %v768 = vpop.f32.mrb[0].mxu0
        %769 = vmatprep.mubr.bf16.mxu0 0
        %770 = vmatmul.mubr.bf16.gmra.mrb[0].mxu0 %v707
        %v771 = vpop.f32.mrb[0].mxu0
        %v772 = vadd.f32 0.0, %v771
        %v773 = vpop.f32.mrb[0].mxu0
        %v774 = vpop.f32.mrb[0].mxu0
        %v775 = vadd.f32 0.0, %v774
        %v776 = vpop.f32.mrb[0].mxu0
        %777 = vmatprep.mubr.bf16.mxu0 0
        %778 = vmatmul.mubr.bf16.gmra.mrb[0].mxu0 %v708
        %v779 = vpop.f32.mrb[0].mxu0
        %v780 = vadd.f32 0.0, %v779
        %v781 = vpop.f32.mrb[0].mxu0
        %v782 = vpop.f32.mrb[0].mxu0
        %v783 = vadd.f32 0.0, %v782
        %v784 = vpop.f32.mrb[0].mxu0
        %785 = vmatprep.mubr.bf16.mxu0 0
        %786 = vmatmul.mubr.bf16.gmra.mrb[0].mxu0 %v709
        %v787 = vpop.f32.mrb[0].mxu0
        %v788 = vadd.f32 0.0, %v787
        %v789 = vpop.f32.mrb[0].mxu0
        %v790 = vpop.f32.mrb[0].mxu0
        %v791 = vadd.f32 0.0, %v790
        %v792 = vpop.f32.mrb[0].mxu0
        %793 = vmatprep.mubr.bf16.mxu0 0
        %794 = vmatmul.mubr.bf16.gmra.mrb[0].mxu0 %v710
        %v795 = vpop.f32.mrb[0].mxu0
        %v796 = vadd.f32 0.0, %v795
        %v797 = vpop.f32.mrb[0].mxu0
        %v798 = vpop.f32.mrb[0].mxu0
        %v799 = vadd.f32 0.0, %v798
        %v800 = vpop.f32.mrb[0].mxu0
        %801 = vmatprep.mubr.bf16.mxu0 0
        %802 = vmatmul.mubr.bf16.gmra.mrb[0].mxu0 %v711
        %v803 = vpop.f32.mrb[0].mxu0
        %v804 = vadd.f32 0.0, %v803
        %v805 = vpop.f32.mrb[0].mxu0
        %v806 = vpop.f32.mrb[0].mxu0
        %v807 = vadd.f32 0.0, %v806
        %v808 = vpop.f32.mrb[0].mxu0
        %809 = vmatprep.mubr.bf16.mxu0 0
        %810 = vmatmul.mubr.bf16.gmra.mrb[0].mxu0 %v712
        %v811 = vpop.f32.mrb[0].mxu0
        %v812 = vadd.f32 0.0, %v811
        %v813 = vpop.f32.mrb[0].mxu0
        %v814 = vpop.f32.mrb[0].mxu0
        %v815 = vadd.f32 0.0, %v814
        %v816 = vpop.f32.mrb[0].mxu0
        %817 = vdwg.mxu0
        %v818 = vadd.f32 %v633, %v756
        %v819 = vadd.f32 %v634, %v759
        %v820 = vadd.f32 %v635, %v764
        %v821 = vadd.f32 %v636, %v767
        %v822 = vadd.f32 %v637, %v772
        %v823 = vadd.f32 %v638, %v775
        %v824 = vadd.f32 %v639, %v780
        %v825 = vadd.f32 %v640, %v783
        %v826 = vadd.f32 %v641, %v788
        %v827 = vadd.f32 %v642, %v791
        %v828 = vadd.f32 %v643, %v796
        %v829 = vadd.f32 %v644, %v799
        %v830 = vadd.f32 %v645, %v804
        %v831 = vadd.f32 %v646, %v807
        %v832 = vadd.f32 %v647, %v812
        %v833 = vadd.f32 %v648, %v815
        %834 = vst [vmem:[#allocation2] sm:$0xff] %v818
        %835 = vst [vmem:[#allocation2 + $0x8] sm:$0xff] %v819
        %836 = vst [vmem:[#allocation2 + $0x10] sm:$0xff] %v820
        %837 = vst [vmem:[#allocation2 + $0x18] sm:$0xff] %v821
        %838 = vst [vmem:[#allocation2 + $0x20] sm:$0xff] %v822
        %839 = vst [vmem:[#allocation2 + $0x28] sm:$0xff] %v823
        %840 = vst [vmem:[#allocation2 + $0x30] sm:$0xff] %v824
        %841 = vst [vmem:[#allocation2 + $0x38] sm:$0xff] %v825
        %842 = vst [vmem:[#allocation2 + $0x40] sm:$0xff] %v826
        %843 = vst [vmem:[#allocation2 + $0x48] sm:$0xff] %v827
        %844 = vst [vmem:[#allocation2 + $0x50] sm:$0xff] %v828
        %845 = vst [vmem:[#allocation2 + $0x58] sm:$0xff] %v829
        %846 = vst [vmem:[#allocation2 + $0x60] sm:$0xff] %v830
        %847 = vst [vmem:[#allocation2 + $0x68] sm:$0xff] %v831
        %848 = vst [vmem:[#allocation2 + $0x70] sm:$0xff] %v832
        %849 = vst [vmem:[#allocation2 + $0x78] sm:$0xff] %v833
        %p850 = scmp.eq.s32.totalorder %s31, 3
        // Predicated region
        $region57: #{tpu_custom_call.1} parent=35 // pred_check
          %p851 = pneg %p850
        $region58: #{tpu_custom_call.1} parent=35 // pred_check_branch
          %853 = sbr.rel (%p851) target = $region60
        $region59: #{tpu_custom_call.1} parent=35 // pred_region
          %v854 = vld [vmem:[#allocation2] sm:$0xff]
          %v855 = vld [vmem:[#allocation2 + $0x8] sm:$0xff]
          %v856 = vld [vmem:[#allocation2 + $0x10] sm:$0xff]
          %v857 = vld [vmem:[#allocation2 + $0x18] sm:$0xff]
          %v858 = vld [vmem:[#allocation2 + $0x20] sm:$0xff]
          %v859 = vld [vmem:[#allocation2 + $0x28] sm:$0xff]
          %v860 = vld [vmem:[#allocation2 + $0x30] sm:$0xff]
          %v861 = vld [vmem:[#allocation2 + $0x38] sm:$0xff]
          %v862 = vld [vmem:[#allocation2 + $0x40] sm:$0xff]
          %v863 = vld [vmem:[#allocation2 + $0x48] sm:$0xff]
          %v864 = vld [vmem:[#allocation2 + $0x50] sm:$0xff]
          %v865 = vld [vmem:[#allocation2 + $0x58] sm:$0xff]
          %v866 = vld [vmem:[#allocation2 + $0x60] sm:$0xff]
          %v867 = vld [vmem:[#allocation2 + $0x68] sm:$0xff]
          %v868 = vld [vmem:[#allocation2 + $0x70] sm:$0xff]
          %v869 = vld [vmem:[#allocation2 + $0x78] sm:$0xff]
          %p870 = scmp.lt.s32.totalorder %s29, 2
          // Predicated region
          $region61: #{tpu_custom_call.1} parent=59 // pred_check
            %p871 = pneg %p870
          $region62: #{tpu_custom_call.1} parent=59 // pred_check_branch
            %873 = sbr.rel (%p871) target = $region64
          $region63: #{tpu_custom_call.1} parent=59 // pred_region
            %v874 = vmax.f32 %v854, 0.0
            %v875 = vmax.f32 %v855, 0.0
            %v876 = vmax.f32 %v856, 0.0
            %v877 = vmax.f32 %v857, 0.0
            %v878 = vmax.f32 %v858, 0.0
            %v879 = vmax.f32 %v859, 0.0
            %v880 = vmax.f32 %v860, 0.0
            %v881 = vmax.f32 %v861, 0.0
            %v882 = vmax.f32 %v862, 0.0
            %v883 = vmax.f32 %v863, 0.0
            %v884 = vmax.f32 %v864, 0.0
            %v885 = vmax.f32 %v865, 0.0
            %v886 = vmax.f32 %v866, 0.0
            %v887 = vmax.f32 %v867, 0.0
            %v888 = vmax.f32 %v868, 0.0
            %v889 = vmax.f32 %v869, 0.0
            %v890 = vpack.c.bf16 %v875, %v874
            %v891 = vpack.c.bf16 %v877, %v876
            %v892 = vpack.c.bf16 %v879, %v878
            %v893 = vpack.c.bf16 %v881, %v880
            %v894 = vpack.c.bf16 %v883, %v882
            %v895 = vpack.c.bf16 %v885, %v884
            %v896 = vpack.c.bf16 %v887, %v886
            %v897 = vpack.c.bf16 %v889, %v888
            %s898 = smul.u32 %s30, 128
            %s899 = sadd.s32 %s346, %s898
            %s900 = sshra.s32 %s899, 4
            %s901 = sand.u32 %s899, 15
            %s902 = smul.addr %s900, 8
            %s903 = scalar_lea.vmem [#allocation3], %s902
            %904 = vst [vmem:[%s903] sm:$0xff] %v890
            %905 = vst [vmem:[%s903 + $0x8] sm:$0xff] %v891
            %906 = vst [vmem:[%s903 + $0x10] sm:$0xff] %v892
            %907 = vst [vmem:[%s903 + $0x18] sm:$0xff] %v893
            %908 = vst [vmem:[%s903 + $0x20] sm:$0xff] %v894
            %909 = vst [vmem:[%s903 + $0x28] sm:$0xff] %v895
            %910 = vst [vmem:[%s903 + $0x30] sm:$0xff] %v896
            %911 = vst [vmem:[%s903 + $0x38] sm:$0xff] %v897
          $region64: #{tpu_custom_call.1} parent=59 // pred_fallthru
            _
          %p912 = scmp.eq.s32.totalorder %s29, 2
          // Predicated region
          $region65: #{tpu_custom_call.1} parent=59 // pred_check
            %p913 = pneg %p912
          $region66: #{tpu_custom_call.1} parent=59 // pred_check_branch
            %915 = sbr.rel (%p913) target = $region68
          $region67: #{tpu_custom_call.1} parent=59 // pred_region
            %v916 = vxor.u32 %v854, 2147483648
            %v917 = vxor.u32 %v855, 2147483648
            %v918 = vxor.u32 %v856, 2147483648
            %v919 = vxor.u32 %v857, 2147483648
            %v920 = vxor.u32 %v858, 2147483648
            %v921 = vxor.u32 %v859, 2147483648
            %v922 = vxor.u32 %v860, 2147483648
            %v923 = vxor.u32 %v861, 2147483648
            %v924 = vxor.u32 %v862, 2147483648
            %v925 = vxor.u32 %v863, 2147483648
            %v926 = vxor.u32 %v864, 2147483648
            %v927 = vxor.u32 %v865, 2147483648
            %v928 = vxor.u32 %v866, 2147483648
            %v929 = vxor.u32 %v867, 2147483648
            %v930 = vxor.u32 %v868, 2147483648
            %v931 = vxor.u32 %v869, 2147483648
            %v932 = vmul.f32 %v916, 1.442695
            %v933 = vpow.pop %v932
            %v934 = vmul.f32 %v917, 1.442695
            %v935 = vpow.pop %v934
            %v936 = vmul.f32 %v918, 1.442695
            %v937 = vpow.pop %v936
            %v938 = vmul.f32 %v919, 1.442695
            %v939 = vpow.pop %v938
            %v940 = vmul.f32 %v920, 1.442695
            %v941 = vpow.pop %v940
            %v942 = vmul.f32 %v921, 1.442695
            %v943 = vpow.pop %v942
            %v944 = vmul.f32 %v922, 1.442695
            %v945 = vpow.pop %v944
            %v946 = vmul.f32 %v923, 1.442695
            %v947 = vpow.pop %v946
            %v948 = vmul.f32 %v924, 1.442695
            %v949 = vpow.pop %v948
            %v950 = vmul.f32 %v925, 1.442695
            %v951 = vpow.pop %v950
            %v952 = vmul.f32 %v926, 1.442695
            %v953 = vpow.pop %v952
            %v954 = vmul.f32 %v927, 1.442695
            %v955 = vpow.pop %v954
            %v956 = vmul.f32 %v928, 1.442695
            %v957 = vpow.pop %v956
            %v958 = vmul.f32 %v929, 1.442695
            %v959 = vpow.pop %v958
            %v960 = vmul.f32 %v930, 1.442695
            %v961 = vpow.pop %v960
            %v962 = vmul.f32 %v931, 1.442695
            %v963 = vpow.pop %v962
            %v964 = vadd.f32 %v933, 1.0
            %v965 = vadd.f32 %v935, 1.0
            %v966 = vadd.f32 %v937, 1.0
            %v967 = vadd.f32 %v939, 1.0
            %v968 = vadd.f32 %v941, 1.0
            %v969 = vadd.f32 %v943, 1.0
            %v970 = vadd.f32 %v945, 1.0
            %v971 = vadd.f32 %v947, 1.0
            %v972 = vadd.f32 %v949, 1.0
            %v973 = vadd.f32 %v951, 1.0
            %v974 = vadd.f32 %v953, 1.0
            %v975 = vadd.f32 %v955, 1.0
            %v976 = vadd.f32 %v957, 1.0
            %v977 = vadd.f32 %v959, 1.0
            %v978 = vadd.f32 %v961, 1.0
            %v979 = vadd.f32 %v963, 1.0
            %v980 = vrcp.pop %v964
            %v981 = vmul.f32 1.0, %v980
            %v982 = vrcp.pop %v965
            %v983 = vmul.f32 1.0, %v982
            %v984 = vrcp.pop %v966
            %v985 = vmul.f32 1.0, %v984
            %v986 = vrcp.pop %v967
            %v987 = vmul.f32 1.0, %v986
            %v988 = vrcp.pop %v968
            %v989 = vmul.f32 1.0, %v988
            %v990 = vrcp.pop %v969
            %v991 = vmul.f32 1.0, %v990
            %v992 = vrcp.pop %v970
            %v993 = vmul.f32 1.0, %v992
            %v994 = vrcp.pop %v971
            %v995 = vmul.f32 1.0, %v994
            %v996 = vrcp.pop %v972
            %v997 = vmul.f32 1.0, %v996
            %v998 = vrcp.pop %v973
            %v999 = vmul.f32 1.0, %v998
            %v1000 = vrcp.pop %v974
            %v1001 = vmul.f32 1.0, %v1000
            %v1002 = vrcp.pop %v975
            %v1003 = vmul.f32 1.0, %v1002
            %v1004 = vrcp.pop %v976
            %v1005 = vmul.f32 1.0, %v1004
            %v1006 = vrcp.pop %v977
            %v1007 = vmul.f32 1.0, %v1006
            %v1008 = vrcp.pop %v978
            %v1009 = vmul.f32 1.0, %v1008
            %v1010 = vrcp.pop %v979
            %v1011 = vmul.f32 1.0, %v1010
            %1012 = vst [vmem:[%s332] sm:$0xff] %v981
            %1013 = vst [vmem:[%s332 + $0x8] sm:$0xff] %v983
            %1014 = vst [vmem:[%s332 + $0x10] sm:$0xff] %v985
            %1015 = vst [vmem:[%s332 + $0x18] sm:$0xff] %v987
            %1016 = vst [vmem:[%s332 + $0x20] sm:$0xff] %v989
            %1017 = vst [vmem:[%s332 + $0x28] sm:$0xff] %v991
            %1018 = vst [vmem:[%s332 + $0x30] sm:$0xff] %v993
            %1019 = vst [vmem:[%s332 + $0x38] sm:$0xff] %v995
            %1020 = vst [vmem:[%s332 + $0x40] sm:$0xff] %v997
            %1021 = vst [vmem:[%s332 + $0x48] sm:$0xff] %v999
            %1022 = vst [vmem:[%s332 + $0x50] sm:$0xff] %v1001
            %1023 = vst [vmem:[%s332 + $0x58] sm:$0xff] %v1003
            %1024 = vst [vmem:[%s332 + $0x60] sm:$0xff] %v1005
            %1025 = vst [vmem:[%s332 + $0x68] sm:$0xff] %v1007
            %1026 = vst [vmem:[%s332 + $0x70] sm:$0xff] %v1009
            %1027 = vst [vmem:[%s332 + $0x78] sm:$0xff] %v1011
          $region68: #{tpu_custom_call.1} parent=59 // pred_fallthru
            _
        $region60: #{tpu_custom_call.1} parent=35 // pred_fallthru
          _
        %s1028 = sand.u32 %s161, 1
        %s1029 = scalar_lea.sflag [#allocation6], %s1028
        %s1030 = sand.u32 %s161, 1
        %s1031 = smul.addr %s1030, 128
        %s1032 = scalar_lea.vmem [#allocation10], %s1031
        // Predicated region
        $region69: #{tpu_custom_call.1} parent=35 // pred_check
          %p1033 = pneg %p171
        $region70: #{tpu_custom_call.1} parent=35 // pred_check_branch
          %1035 = sbr.rel (%p1033) target = $region72
        $region71: #{tpu_custom_call.1} parent=35 // pred_region
          %s1036 = smul.u32 16, %s30
          %s1038 = ssub.s32 2048, 2048
          %1039 = vsyncadd %s1029, %s1038
          %s1040 = smul.addr %s1036, 128
          %s1041 = scalar_lea.hbm %s4, %s1040
          %s1042 = sshll.u32 %s1032, 4
          %s1043 = int_to_ptr.vmem [resolvable:$true] %s1042
          %1048 = dma.vmem_to_hbm [thread:$0]  %s1043, 2048, %s1041, %s1029, 128, 128, 8
        $region72: #{tpu_custom_call.1} parent=35 // pred_fallthru
          _
      $region36: #{tpu_custom_call.1} parent=5 // pred_fallthru
        _
      %p1049 = scmp.le.s32.totalorder 2, %s19
      // Predicated region
      $region73: #{tpu_custom_call.1} parent=5 // pred_check
        %p1050 = pneg %p1049
      $region74: #{tpu_custom_call.1} parent=5 // pred_check_branch
        %1052 = sbr.rel (%p1050) target = $region76
      $region75: #{tpu_custom_call.1} parent=5 // pred_region
        %s1053 = ssub.s32 %s19, 2
        // Predicated region
        $region77: #{tpu_custom_call.1} parent=75 // pred_check
          %p1054 = pneg %p177
        $region78: #{tpu_custom_call.1} parent=75 // pred_check_branch
          %1056 = sbr.rel (%p1054) target = $region80
        $region79: #{tpu_custom_call.1} parent=75 // pred_region
          %s1057 = sand.u32 %s162, 1
          %s1058 = scalar_lea.sflag [#allocation6], %s1057
          %s1059 = sand.u32 %s162, 1
          %s1060 = smul.addr %s1059, 128
          %s1061 = scalar_lea.vmem [#allocation10], %s1060
          %1062 = dma.done %s1058, 2048
        $region80: #{tpu_custom_call.1} parent=75 // pred_fallthru
          _
      $region76: #{tpu_custom_call.1} parent=5 // pred_fallthru
        _
    $region6: #{tpu_custom_call.1} parent=1 // loop_footer
      %s23 = sadd.s32 1, %s19
    $region7: #{tpu_custom_call.1} parent=1 // loop_footer_branch
      %18 = sbr.rel target = $region3
    $region8: #{tpu_custom_call.1} parent=1 // loop_exit
      _
    %1063 = vsyncpa [#allocation5], 1
    %s1064 = scalar_lea.sflag [#allocation5], 1
    %1065 = vsyncpa %s1064, 1
    %1066 = vsyncpa [#allocation8], 1
    %s1067 = scalar_lea.sflag [#allocation8], 1
    %1068 = vsyncpa %s1067, 1
    %1069 = vsyncpa [#allocation6], 1
    %s1070 = scalar_lea.sflag [#allocation6], 1
    %1071 = vsyncpa %s1070, 1

</llo_original>
